<compile_context>
chip_gen: v7x
topology: tpu7x:2x2x1
jax: 0.10.0
libtpu: 0.0.40
codegen_flags: <defaults>
</compile_context>

<pallas_src>
import jax
import jax.numpy as jnp
from jax.experimental import pallas as pl
from jax.experimental.pallas import tpu as pltpu

EPS = 1e-6


def _layernorm_kernel(alpha_ref, beta_ref, x_ref, o_ref):
    # x_ref: (ROW_TILE, D) tile in VMEM; alpha/beta: (1,) scalars in SMEM.
    x = x_ref[...].astype(jnp.float32)
    d = x.shape[-1]
    denom = max(d - 1, 1)  # PyTorch unbiased std; guard d == 1
    mean = jnp.mean(x, axis=-1, keepdims=True)
    diff = x - mean
    var = jnp.sum(diff * diff, axis=-1, keepdims=True) * (1.0 / denom)
    std = jnp.sqrt(var)
    # Exact reciprocal over a tiny (ROW_TILE, 1) column: matches PyTorch's
    # division (the approx EUP reciprocal previously broke the tolerance check
    # and the column is far too small for approx to matter for performance).
    inv = 1.0 / (std + EPS)
    alpha = alpha_ref[0].astype(jnp.float32)
    beta = beta_ref[0].astype(jnp.float32)
    o_ref[...] = (diff * (alpha * inv) + beta).astype(o_ref.dtype)


def _round_up(v, m):
    return -(-v // m) * m


def _vmem_budgets():
    """(working-set budget, vmem_limit_bytes) — TPU-generation aware."""
    try:
        cap = pltpu.get_tpu_info().vmem_capacity_bytes
    except Exception:
        cap = None
    if cap is not None and cap >= 96 * 1024 * 1024:
        # 128 MiB-VMEM chips (v5e / v6e): use the extra room for bigger tiles.
        return 56 * 1024 * 1024, 96 * 1024 * 1024
    # v7x (64 MiB per TensorCore) or unknown generation: conservative headroom.
    return 24 * 1024 * 1024, 48 * 1024 * 1024


def _choose_row_tile(rows, d, itemsize, budget):
    """Largest row tile whose double-buffered in+out slabs fit `budget`,
    then shrunk so there are >= ~8 grid steps (>= ~4 per v7x TensorCore, so
    the BlockSpec double-buffer actually pipelines) when rows allow."""
    per_row_bytes = max(4 * d * itemsize, 1)  # (in + out) * 2 buffers
    tile = max(int(budget // per_row_bytes), 16)
    tile = (tile // 16) * 16                  # bf16-safe sublane packing
    rows16 = _round_up(rows, 16)
    tile = min(tile, rows16)
    target_steps = 8                          # ~4 per core on v7x megacore
    per_step = _round_up(-(-rows16 // target_steps), 16)
    if 16 <= per_step < tile:
        tile = per_step
    return max(tile, 16)


def pallas_layernorm(x, alpha, beta, *, row_tile=None):
    """x: (..., d_model) -> same shape, PyTorch-LayerNormalization over last dim."""
    orig_shape = x.shape
    d = orig_shape[-1]
    rows = 1
    for s in orig_shape[:-1]:
        rows *= s
    x2 = x.reshape(rows, d)

    itemsize = jnp.dtype(x.dtype).itemsize
    budget, vmem_limit = _vmem_budgets()
    if row_tile is None:
        row_tile = _choose_row_tile(rows, d, itemsize, budget)

    # No host-side pad / slice: the grid covers cdiv(rows, row_tile) and the
    # ragged last block is boundary-masked by Pallas. The math is strictly
    # per-row, so don't-care OOB rows cannot contaminate real rows, and the
    # +eps keeps their divide finite; their writes are dropped.
    grid = (pl.cdiv(rows, row_tile),)

    # TODO(synk): for d_model < 128 (like the demo's d=32) output stores are
    # lane-masked; a lane-dense repack (128//d rows per lane row + segmented
    # reduction) would recover full lane bandwidth, but real transformer
    # d_model (>= 512, multiple of 128) makes it a no-op.

    cost = pl.CostEstimate(
        flops=7 * rows * d,
        transcendentals=rows,
        bytes_accessed=2 * rows * d * itemsize,
    )

    out = pl.pallas_call(
        _layernorm_kernel,
        out_shape=jax.ShapeDtypeStruct((rows, d), x.dtype),
        grid_spec=pltpu.PrefetchScalarGridSpec(
            num_scalar_prefetch=0,
            grid=grid,
            in_specs=[
                pl.BlockSpec(memory_space=pltpu.MemorySpace.SMEM),   # alpha
                pl.BlockSpec(memory_space=pltpu.MemorySpace.SMEM),   # beta
                pl.BlockSpec((row_tile, d), lambda i: (i, 0)),       # x tile
            ],
            out_specs=pl.BlockSpec((row_tile, d), lambda i: (i, 0)),
        ),
        compiler_params=pltpu.CompilerParams(
            dimension_semantics=("parallel",),
            vmem_limit_bytes=vmem_limit,
        ),
        cost_estimate=cost,
    )(alpha, beta, x2)

    return out.reshape(orig_shape)


def decoder_forward(x, encoder_output, enc_mask, dec_mask, layers, alpha, beta):
    # TODO(synk): decoder block layers are opaque (a passed-in nn.ModuleList in
    # the reference); here `layers` is a (possibly empty) list of JAX callables.
    for layer in layers:
        x = layer(x, encoder_output, enc_mask, dec_mask)
    return pallas_layernorm(x, alpha, beta)


if __name__ == "__main__":
    key = jax.random.PRNGKey(0)
    k1, k2 = jax.random.split(key)

    batch, seq, d_model = 2, 8, 32
    x = jax.random.normal(k1, (batch, seq, d_model), dtype=jnp.float32)
    encoder_output = jax.random.normal(k2, (batch, seq, d_model), dtype=jnp.float32)
    enc_mask = jnp.ones((batch, 1, 1, seq), dtype=jnp.float32)
    dec_mask = jnp.tril(jnp.ones((seq, seq), dtype=jnp.float32))[None, None]

    # Deterministic parameter init, matching nn.Parameter(torch.ones(1)/zeros(1)).
    alpha = jnp.ones((1,), dtype=jnp.float32)
    beta = jnp.zeros((1,), dtype=jnp.float32)

    out = decoder_forward(x, encoder_output, enc_mask, dec_mask,
                          layers=[], alpha=alpha, beta=beta)
    jax.block_until_ready(out)

    # Reference in plain JAX (PyTorch semantics: unbiased std, eps added to std).
    mean = jnp.mean(x, axis=-1, keepdims=True)
    std = jnp.sqrt(jnp.sum((x - mean) ** 2, axis=-1, keepdims=True) / (d_model - 1))
    ref = alpha[0] * (x - mean) / (std + EPS) + beta[0]
    assert jnp.allclose(out, ref, atol=1e-4, rtol=1e-4), "mismatch vs reference"

    print("KERNEL_OK")
</pallas_src>

<mosaic_0001>
module attributes {stable_mosaic.version = 11 : i64} {
  func.func @_layernorm_kernel(%arg0: i32, %arg1: memref<1xf32, #tpu.memory_space<smem>>, %arg2: memref<1xf32, #tpu.memory_space<smem>>, %arg3: memref<16x32xf32, #tpu.memory_space<vmem>>, %arg4: memref<16x32xf32, #tpu.memory_space<vmem>>) attributes {dimension_semantics = [#tpu.dimension_semantics<parallel>], iteration_bounds = array<i64: 1>, scalar_prefetch = 0 : i64, scratch_operands = 0 : i64, tpu.core_type = #tpu.core_type<tc>, window_params = [{transform_indices = @transform_0, window_bounds = array<i64: 1>}, {transform_indices = @transform_1, window_bounds = array<i64: 1>}, {transform_indices = @transform_2, window_bounds = array<i64: 16, 32>}, {transform_indices = @transform_3, window_bounds = array<i64: 16, 32>}]} {
    %c0 = arith.constant 0 : index
    %c0_0 = arith.constant 0 : index
    %0 = vector.load %arg3[%c0, %c0_0] : memref<16x32xf32, #tpu.memory_space<vmem>>, vector<16x32xf32>
    %cst = arith.constant dense<0.000000e+00> : vector<16xf32>
    %1 = vector.multi_reduction <add>, %0, %cst [1] : vector<16x32xf32> to vector<16xf32>
    %2 = vector.shape_cast %1 : vector<16xf32> to vector<16x1xf32>
    %cst_1 = arith.constant 3.200000e+01 : f32
    %3 = vector.broadcast %cst_1 : f32 to vector<16x1xf32>
    %4 = arith.divf %2, %3 : vector<16x1xf32>
    %5 = vector.broadcast %4 : vector<16x1xf32> to vector<16x32xf32>
    %6 = arith.subf %0, %5 : vector<16x32xf32>
    %7 = arith.mulf %6, %6 : vector<16x32xf32>
    %cst_2 = arith.constant dense<0.000000e+00> : vector<16xf32>
    %8 = vector.multi_reduction <add>, %7, %cst_2 [1] : vector<16x32xf32> to vector<16xf32>
    %9 = vector.shape_cast %8 : vector<16xf32> to vector<16x1xf32>
    %cst_3 = arith.constant 0.0322580636 : f32
    %10 = vector.broadcast %cst_3 : f32 to vector<16x1xf32>
    %11 = arith.mulf %9, %10 : vector<16x1xf32>
    %12 = math.sqrt %11 : vector<16x1xf32>
    %cst_4 = arith.constant 9.99999997E-7 : f32
    %13 = vector.broadcast %cst_4 : f32 to vector<16x1xf32>
    %14 = arith.addf %12, %13 : vector<16x1xf32>
    %cst_5 = arith.constant 1.000000e+00 : f32
    %15 = vector.broadcast %cst_5 : f32 to vector<16x1xf32>
    %16 = arith.divf %15, %14 : vector<16x1xf32>
    %c0_6 = arith.constant 0 : index
    %17 = memref.load %arg1[%c0_6] : memref<1xf32, #tpu.memory_space<smem>>
    %c0_7 = arith.constant 0 : index
    %18 = memref.load %arg2[%c0_7] : memref<1xf32, #tpu.memory_space<smem>>
    %19 = vector.broadcast %17 : f32 to vector<16x1xf32>
    %20 = arith.mulf %19, %16 : vector<16x1xf32>
    %21 = vector.broadcast %20 : vector<16x1xf32> to vector<16x32xf32>
    %22 = arith.mulf %6, %21 : vector<16x32xf32>
    %23 = vector.broadcast %18 : f32 to vector<16x32xf32>
    %24 = arith.addf %22, %23 : vector<16x32xf32>
    %c0_8 = arith.constant 0 : index
    %c0_9 = arith.constant 0 : index
    %25 = vector.load %arg4[%c0_8, %c0_9] : memref<16x32xf32, #tpu.memory_space<vmem>>, vector<16x32xf32>
    tpu.vector_store %arg4[%c0_8, %c0_9], %24 {strides = array<i32>} : memref<16x32xf32, #tpu.memory_space<vmem>>, vector<16x32xf32>,
    return
  }
  func.func @transform_0(%arg0: i32) -> i32 {
    %c0_i32 = arith.constant 0 : i32
    %c0_i32_0 = arith.constant 0 : i32
    return %c0_i32 : i32
  }
  func.func @transform_1(%arg0: i32) -> i32 {
    %c0_i32 = arith.constant 0 : i32
    %c0_i32_0 = arith.constant 0 : i32
    return %c0_i32 : i32
  }
  func.func @transform_2(%arg0: i32) -> (i32, i32) {
    %c0_i32 = arith.constant 0 : i32
    %c0_i32_0 = arith.constant 0 : i32
    return %arg0, %c0_i32 : i32, i32
  }
  func.func @transform_3(%arg0: i32) -> (i32, i32) {
    %c0_i32 = arith.constant 0 : i32
    %c0_i32_0 = arith.constant 0 : i32
    return %arg0, %c0_i32 : i32, i32
  }
}

</mosaic_0001>

<llo_original>
// kernel: tpu_custom_call.1
$region0: #{tpu_custom_call.1}
  #allocation0 [shape = 'u32[]', space=smem, size = 0x4, offset = 0x4, fixed_abs, tag = 'smem constant byte address 0x4 - core index']
  #allocation1 [shape = 'u32[144,128]{1,0:T(1,128)}', space=vmem, size = 0x12000, scoped, tag = 'internal scratch']
  #allocation2 [shape = 'f32[1]{0:T(128)S(6)}', space=smem, size = 0x200, scoped, tag = 'scoped memory for tpu_custom_call.1']
  #allocation3 [shape = 'f32[1]{0:T(128)S(6)}', space=smem, size = 0x200, scoped, tag = 'scoped memory for tpu_custom_call.1']
  %s0 = inlined_call_operand.<no memory space> [shape: f32[1], index: 0, kind: input, shape index: {}]
  %s1 = inlined_call_operand.<no memory space> [shape: f32[1], index: 1, kind: input, shape index: {}]
  %s2 = inlined_call_operand.hbm [shape: f32[16,32], index: 2, kind: input, shape index: {}]
  %s3 = inlined_call_operand.hbm [shape: f32[16,32], index: 3, kind: output, shape index: {}]
  %s4 = sld [smem:[#allocation0]]
  $region26: #{tpu_custom_call.1} parent=0
    _
  %s6 = ssub.s32 1, %s4
  %s7 = scalar_select 0, %s6, %s4
  %8 = sst [smem:[#allocation2]] %s0
  %9 = sst [smem:[#allocation3]] %s1
  $region1: #{tpu_custom_call.1} parent=0
    #allocation4 [shape = 'u8[8192]{0}', space=vmem, size = 0x2000, scoped, tag = 'input window, operand 2, single buffered']
    #allocation5 [shape = 's32[1]{0}', space=sflag, size = 0x4, scoped, tag = 'scoped memory for tpu_custom_call.1']
    #allocation6 [shape = 's32[1]{0}', space=sflag, size = 0x4, scoped, tag = 'scoped memory for tpu_custom_call.1']
    #allocation7 [shape = 'u8[8192]{0}', space=vmem, size = 0x2000, scoped, tag = 'output window, operand 0, single buffered']
    %10 = vsyncpa [#allocation5], 0
    %11 = vsyncpa [#allocation6], 0
    // Predicated region
    $region2: #{tpu_custom_call.1} parent=1 // pred_check
      _
    $region3: #{tpu_custom_call.1} parent=1 // pred_check_branch
      %13 = sbr.rel (0) target = $region5
    $region4: #{tpu_custom_call.1} parent=1 // pred_region
      _
    $region5: #{tpu_custom_call.1} parent=1 // pred_fallthru
      _
    // Predicated region
    $region6: #{tpu_custom_call.1} parent=1 // pred_check
      _
    $region7: #{tpu_custom_call.1} parent=1 // pred_check_branch
      %15 = sbr.rel (0) target = $region9
    $region8: #{tpu_custom_call.1} parent=1 // pred_region
      _
    $region9: #{tpu_custom_call.1} parent=1 // pred_fallthru
      _
    // Predicated region
    $region10: #{tpu_custom_call.1} parent=1 // pred_check
      _
    $region11: #{tpu_custom_call.1} parent=1 // pred_check_branch
      %17 = sbr.rel (0) target = $region13
    $region12: #{tpu_custom_call.1} parent=1 // pred_region
      %s19 = ssub.s32 256, 256
      %20 = vsyncadd [#allocation5], %s19
      %s21 = sshll.u32 [#allocation4], 4
      %s22 = int_to_ptr.vmem [resolvable:$true] %s21
      %27 = dma.hbm_to_vmem [thread:$0]  %s2, 256, %s22, [#allocation5], 128, 128, 8
    $region13: #{tpu_custom_call.1} parent=1 // pred_fallthru
      _
    // Predicated region
    $region14: #{tpu_custom_call.1} parent=1 // pred_check
      _
    $region15: #{tpu_custom_call.1} parent=1 // pred_check_branch
      %29 = sbr.rel (0) target = $region17
    $region16: #{tpu_custom_call.1} parent=1 // pred_region
      %30 = dma.done [#allocation5], 256
    $region17: #{tpu_custom_call.1} parent=1 // pred_fallthru
      _
    %v31 = vld [vmem:[#allocation4] sm:$0xff]
    %v32 = vld [vmem:[#allocation4 + $0x8] sm:$0xff]
    %vm33 = vcmask 261120
    %v34 = vsel %vm33, %v31, 0.0
    %35 = vadd.xlane.f32.xlu0 %v34
    %v36 = vpop.xlane.xlu0 %35
    %v37 = vsel %vm33, %v32, 0.0
    %38 = vadd.xlane.f32.xlu0 %v37
    %v39 = vpop.xlane.xlu0 %38
    %v40 = vrcp.pop 32.0
    %v41 = vmul.f32 %v36, %v40
    %v42 = vmul.f32 %v39, %v40
    %v43 = vsub.f32 %v31, %v41
    %v44 = vsub.f32 %v32, %v42
    %v45 = vmul.f32 %v43, %v43
    %v46 = vmul.f32 %v44, %v44
    %v47 = vsel %vm33, %v45, 0.0
    %48 = vadd.xlane.f32.xlu0 %v47
    %v49 = vpop.xlane.xlu0 %48
    %v50 = vsel %vm33, %v46, 0.0
    %51 = vadd.xlane.f32.xlu0 %v50
    %v52 = vpop.xlane.xlu0 %51
    %v53 = vmul.f32 %v49, 0.032258064
    %v54 = vmul.f32 %v52, 0.032258064
    %v55 = vrsqrt.pop %v53
    %v56 = vmul.f32 %v53, %v55
    %vm57 = vcmp.eq.f32.partialorder %v53, inf
    %v58 = vsel %vm57, %v53, %v56
    %vm59 = vcmp.eq.f32.partialorder %v53, 0.0
    %v60 = vand.u32 %v53, 2147483648
    %v61 = vsel %vm59, %v60, %v58
    %v62 = vrsqrt.pop %v54
    %v63 = vmul.f32 %v54, %v62
    %vm64 = vcmp.eq.f32.partialorder %v54, inf
    %v65 = vsel %vm64, %v54, %v63
    %vm66 = vcmp.eq.f32.partialorder %v54, 0.0
    %v67 = vand.u32 %v54, 2147483648
    %v68 = vsel %vm66, %v67, %v65
    %v69 = vadd.f32 %v61, 1e-06
    %v70 = vadd.f32 %v68, 1e-06
    %v71 = vrcp.pop %v69
    %v72 = vmul.f32 1.0, %v71
    %v73 = vrcp.pop %v70
    %v74 = vmul.f32 1.0, %v73
    %s75 = sld [smem:[#allocation2]]
    %s76 = sld [smem:[#allocation3]]
    %v77 = vstv %s75
    %v78 = vmul.f32 %v77, %v72
    %v79 = vmul.f32 %v77, %v74
    %v80 = vmul.f32 %v43, %v78
    %v81 = vmul.f32 %v44, %v79
    %v82 = vstv %s76
    %v83 = vadd.f32 %v80, %v82
    %v84 = vadd.f32 %v81, %v82
    %85 = vst.msk [vmem:[#allocation7] sm:$0xff] %vm33, %v83
    %86 = vst.msk [vmem:[#allocation7 + $0x8] sm:$0xff] %vm33, %v84
    // Predicated region
    $region18: #{tpu_custom_call.1} parent=1 // pred_check
      _
    $region19: #{tpu_custom_call.1} parent=1 // pred_check_branch
      %88 = sbr.rel (0) target = $region21
    $region20: #{tpu_custom_call.1} parent=1 // pred_region
      %s90 = ssub.s32 256, 256
      %91 = vsyncadd [#allocation6], %s90
      %s92 = sshll.u32 [#allocation7], 4
      %s93 = int_to_ptr.vmem [resolvable:$true] %s92
      %98 = dma.vmem_to_hbm [thread:$0]  %s93, 256, %s3, [#allocation6], 128, 128, 8
    $region21: #{tpu_custom_call.1} parent=1 // pred_fallthru
      _
    // Predicated region
    $region22: #{tpu_custom_call.1} parent=1 // pred_check
      _
    $region23: #{tpu_custom_call.1} parent=1 // pred_check_branch
      %100 = sbr.rel (0) target = $region25
    $region24: #{tpu_custom_call.1} parent=1 // pred_region
      %101 = dma.done [#allocation6], 256
    $region25: #{tpu_custom_call.1} parent=1 // pred_fallthru
      _
    %102 = vsyncpa [#allocation5], 1
    %103 = vsyncpa [#allocation6], 1

</llo_original>
